<compile_context>
chip_gen: v7x
topology: tpu7x:2x2x1
jax: 0.10.0
libtpu: 0.0.40
codegen_flags: <defaults>
</compile_context>

<pallas_src>
import functools

import jax
import jax.numpy as jnp
from jax import lax
from jax.experimental import pallas as pl
from jax.experimental.pallas import tpu as pltpu

_VMEM_LIMIT = 32 * 1024 * 1024     # explicit scoped-VMEM budget, portable v5e..v7x
_FUSED_TARGET_BYTES = 2 << 20      # ~2 MiB input tiles for the fused kernels
_SLAB_TARGET_BYTES = 4 << 20       # ~4 MiB blocks for the fallback slab kernel


def _sublane_multiple(dtype):
    # 8 rows for 4-byte, 16 for 2-byte, 32 for 1-byte dtypes (sublane packing).
    return max(8, 32 // jnp.dtype(dtype).itemsize)


# --------------------------- kernels ---------------------------------------

def _fused_select(x_ref):
    """(1, C, T) block -> (C, T) values with sigmoid applied to channel rows < 2."""
    x = x_ref[0]                                        # (C, T), lane-dense on T
    xf = x.astype(jnp.float32)                          # f32 compute (v5e-safe for bf16)
    ch = lax.broadcasted_iota(jnp.int32, x.shape, 0)    # sublane (channel) index
    y = jnp.where(ch < 2, jax.nn.sigmoid(xf), xf)       # EUP work on extra rows = free slack
    return y.astype(x.dtype)


def _fused_dense_kernel(x_ref, o_ref):
    # o_ref block: (1, R, 128) lane-dense NHWC flat rows, R = T*C // 128.
    y = _fused_select(x_ref)                            # (C, T)
    yt = jnp.transpose(y, (1, 0))                       # (T, C) relayout in VMEM (XLU)
    o_ref[0] = jnp.reshape(yt, o_ref.shape[1:])         # 128-wide rows -> unmasked stores


def _fused_nhwc_kernel(x_ref, o_ref):
    # o_ref block: (1, T, C): natural NHWC tile (lane-sparse stores).
    y = _fused_select(x_ref)
    o_ref[0] = jnp.transpose(y, (1, 0))


def _sigmoid_slab_kernel(x_ref, o_ref):
    # Elementwise sigmoid over a lane-dense (rows, H*W) tile (fallback path).
    o_ref[...] = jax.nn.sigmoid(x_ref[...].astype(jnp.float32)).astype(o_ref.dtype)


# --------------------------- builders ---------------------------------------

def _hw_tile(hw, c, itemsize, lane_multiple, target_bytes):
    """H*W tile: full extent if the per-batch slab is small, else ~target, aligned."""
    if hw * c * itemsize <= target_bytes:
        return hw
    t = (target_bytes // (c * itemsize)) // lane_multiple * lane_multiple
    t = max(lane_multiple, t)
    return hw if t >= hw else t


def _build_fused_dense(n, c, h, w, dtype, target_bytes):
    hw = h * w
    hwc = hw * c
    if hwc % 128 != 0:
        return None                                     # flat slab not 128-divisible
    itemsize = jnp.dtype(dtype).itemsize
    # lane_multiple=1024 keeps (t*c/128) a multiple of 8 for any C when tiling.
    t = _hw_tile(hw, c, itemsize, 1024, target_bytes)
    r_total = hwc // 128
    r_blk = (t * c) // 128

    def fwd(x):
        x3 = x.reshape(n, c, hw)                        # free metadata reshape
        out = pl.pallas_call(
            _fused_dense_kernel,
            out_shape=jax.ShapeDtypeStruct((n, r_total, 128), x.dtype),
            grid=(n, pl.cdiv(hw, t)),                   # masked tail block if needed
            in_specs=[pl.BlockSpec((1, c, t), lambda b, j: (b, 0, j))],
            out_specs=pl.BlockSpec((1, r_blk, 128), lambda b, j: (b, j, 0)),
            compiler_params=pltpu.CompilerParams(
                dimension_semantics=("parallel", "parallel"),
                vmem_limit_bytes=_VMEM_LIMIT),
        )(x3)
        return out.reshape(n, h, w, c)                  # free row-major reshape
    return fwd


def _build_fused_nhwc(n, c, h, w, dtype, target_bytes):
    hw = h * w
    itemsize = jnp.dtype(dtype).itemsize
    t = _hw_tile(hw, c, itemsize, 128, target_bytes)

    def fwd(x):
        x3 = x.reshape(n, c, hw)
        out = pl.pallas_call(
            _fused_nhwc_kernel,
            out_shape=jax.ShapeDtypeStruct((n, hw, c), x.dtype),
            grid=(n, pl.cdiv(hw, t)),
            in_specs=[pl.BlockSpec((1, c, t), lambda b, j: (b, 0, j))],
            out_specs=pl.BlockSpec((1, t, c), lambda b, j: (b, j, 0)),
            compiler_params=pltpu.CompilerParams(
                dimension_semantics=("parallel", "parallel"),
                vmem_limit_bytes=_VMEM_LIMIT),
        )(x3)
        return out.reshape(n, h, w, c)
    return fwd


def _build_slab(n, c, h, w, dtype, target_bytes):
    # Known-good fallback: sigmoid on the contiguous 2-channel slab in NCHW
    # layout (lane-dense on H*W); the NCHW->NHWC permute + concat stays in XLA.
    hw = h * w
    m2 = n * 2
    row_bytes = hw * jnp.dtype(dtype).itemsize
    target_bytes = max(target_bytes, _SLAB_TARGET_BYTES)
    if m2 * row_bytes <= 2 * target_bytes:
        tm = m2                                         # size-based rule: don't split small slabs
    else:
        sub = _sublane_multiple(dtype)
        tm = max(1, min(m2, target_bytes // max(1, row_bytes)))
        if tm < m2:
            tm = min(m2, max(sub, (tm // sub) * sub))   # dtype-aware sublane rounding

    def fwd(x):
        xy = x[:, 0:2, :, :].reshape(m2, hw)
        xy_sig = pl.pallas_call(
            _sigmoid_slab_kernel,
            out_shape=jax.ShapeDtypeStruct((m2, hw), x.dtype),
            grid=(pl.cdiv(m2, tm),),
            in_specs=[pl.BlockSpec((tm, hw), lambda i: (i, 0))],
            out_specs=pl.BlockSpec((tm, hw), lambda i: (i, 0)),
            compiler_params=pltpu.CompilerParams(
                dimension_semantics=("parallel",),
                vmem_limit_bytes=_VMEM_LIMIT),
        )(xy)
        xy_nhwc = jnp.transpose(xy_sig.reshape(n, 2, h, w), (0, 2, 3, 1))
        rest_nhwc = jnp.transpose(x[:, 2:, :, :], (0, 2, 3, 1))
        return jnp.concatenate([xy_nhwc, rest_nhwc], axis=-1)
    return fwd


# --------------------------- planning / public API ---------------------------

@functools.lru_cache(maxsize=None)
def _plan(n, c, h, w, dtype_name, target_bytes):
    """Pick the best tier that lowers for this shape (AOT compile probe)."""
    dtype = jnp.dtype(dtype_name)
    x_spec = jax.ShapeDtypeStruct((n, c, h, w), dtype)
    for build in (_build_fused_dense, _build_fused_nhwc):
        fwd = build(n, c, h, w, dtype, target_bytes)
        if fwd is None:
            continue
        jitted = jax.jit(fwd)
        try:
            jitted.lower(x_spec).compile()              # probe Mosaic lowering
            return jitted
        except Exception:                               # fall through to the next tier
            continue
    return jax.jit(_build_slab(n, c, h, w, dtype, target_bytes))


def yolo_block_forward(x_nchw, *, block_target_bytes=None):
    """x_nchw: (N, C, H, W). Returns (N, H, W, C) with sigmoid on channels 0:2."""
    n, c, h, w = x_nchw.shape
    tgt = _FUSED_TARGET_BYTES if block_target_bytes is None else int(block_target_bytes)
    fwd = _plan(n, c, h, w, jnp.dtype(x_nchw.dtype).name, tgt)
    return fwd(x_nchw)


def yolo_block_reference(x_nchw):
    xt = jnp.transpose(x_nchw, (0, 2, 3, 1))
    return jnp.concatenate([jax.nn.sigmoid(xt[..., 0:2]), xt[..., 2:]], axis=-1)


def _check(x, **kw):
    out = jax.block_until_ready(yolo_block_forward(x, **kw))
    ref = yolo_block_reference(x)
    n, c, h, w = x.shape
    assert out.shape == (n, h, w, c), out.shape
    assert out.dtype == x.dtype, out.dtype
    assert jnp.allclose(out, ref, atol=1e-6, rtol=1e-6), "mismatch vs reference"


if __name__ == "__main__":
    # YOLOBlock.forward only needs the feature map; C = (num_classes + 5) * A.
    # Synthetic small shapes: num_classes=7, A=1 -> C=12.
    key = jax.random.PRNGKey(0)
    k1, k2, k3, k4 = jax.random.split(key, 4)

    # H*W*C % 128 == 0 -> lane-dense fused path, full-extent hw block.
    _check(jax.random.normal(k1, (2, 12, 16, 16), dtype=jnp.float32))
    # H*W*C % 128 != 0 (hw=130) -> NHWC-block fused path (or slab fallback).
    _check(jax.random.normal(k2, (2, 12, 10, 13), dtype=jnp.float32))
    # Forced small block target -> hw tiling with a masked tail block (lane-dense path).
    _check(jax.random.normal(k3, (2, 12, 40, 32), dtype=jnp.float32),
           block_target_bytes=48 * 1024)
    # hw tiling with a ragged tail on the NHWC-block path (H*W*C % 128 != 0).
    _check(jax.random.normal(k4, (2, 12, 20, 20), dtype=jnp.float32),
           block_target_bytes=8 * 1024)

    print("KERNEL_OK")
</pallas_src>

<mosaic_0001>
module attributes {stable_mosaic.version = 11 : i64} {
  func.func @_sigmoid_slab_kernel(%arg0: i32, %arg1: memref<4x256xf32, #tpu.memory_space<vmem>>, %arg2: memref<4x256xf32, #tpu.memory_space<vmem>>) attributes {dimension_semantics = [#tpu.dimension_semantics<parallel>], iteration_bounds = array<i64: 1>, scalar_prefetch = 0 : i64, scratch_operands = 0 : i64, tpu.core_type = #tpu.core_type<tc>, window_params = [{transform_indices = @transform_0, window_bounds = array<i64: 4, 256>}, {transform_indices = @transform_1, window_bounds = array<i64: 4, 256>}]} {
    %c0 = arith.constant 0 : index
    %c0_0 = arith.constant 0 : index
    %0 = vector.load %arg1[%c0, %c0_0] : memref<4x256xf32, #tpu.memory_space<vmem>>, vector<4x256xf32>
    %1 = arith.negf %0 : vector<4x256xf32>
    %2 = math.exp %1 : vector<4x256xf32>
    %cst = arith.constant 1.000000e+00 : f32
    %3 = vector.broadcast %cst : f32 to vector<4x256xf32>
    %4 = arith.addf %3, %2 : vector<4x256xf32>
    %5 = arith.divf %3, %4 : vector<4x256xf32>
    %c0_1 = arith.constant 0 : index
    %c0_2 = arith.constant 0 : index
    %6 = vector.load %arg2[%c0_1, %c0_2] : memref<4x256xf32, #tpu.memory_space<vmem>>, vector<4x256xf32>
    tpu.vector_store %arg2[%c0_1, %c0_2], %5 {strides = array<i32>} : memref<4x256xf32, #tpu.memory_space<vmem>>, vector<4x256xf32>,
    return
  }
  func.func @transform_0(%arg0: i32) -> (i32, i32) {
    %c0_i32 = arith.constant 0 : i32
    %c0_i32_0 = arith.constant 0 : i32
    return %arg0, %c0_i32 : i32, i32
  }
  func.func @transform_1(%arg0: i32) -> (i32, i32) {
    %c0_i32 = arith.constant 0 : i32
    %c0_i32_0 = arith.constant 0 : i32
    return %arg0, %c0_i32 : i32, i32
  }
}

</mosaic_0001>

<llo_original>
// kernel: fwd.1
$region0: #{fwd.1}
  #allocation0 [shape = 'u32[]', space=smem, size = 0x4, offset = 0x4, fixed_abs, tag = 'smem constant byte address 0x4 - core index']
  #allocation1 [shape = 'u32[144,128]{1,0:T(1,128)}', space=vmem, size = 0x12000, scoped, tag = 'internal scratch']
  %s0 = inlined_call_operand.vmem [shape: f32[4,256], index: 0, kind: input, shape index: {}]
  %s1 = inlined_call_operand.vmem [shape: f32[4,256], index: 1, kind: output, shape index: {}]
  %s2 = sld [smem:[#allocation0]]
  $region14: #{fwd.1} parent=0
    _
  %s4 = ssub.s32 1, %s2
  %s5 = scalar_select 0, %s4, %s2
  // Predicated region
  $region2: #{fwd.1} parent=0 // pred_check
    _
  $region3: #{fwd.1} parent=0 // pred_check_branch
    %7 = sbr.rel (0) target = $region5
  $region4: #{fwd.1} parent=0 // pred_region
    _
  $region5: #{fwd.1} parent=0 // pred_fallthru
    _
  %v8 = vld [vmem:[%s0] sm:$0xff]
  %v9 = vxor.u32 %v8, 2147483648
  %v10 = vmul.f32 %v9, 1.442695
  %v11 = vpow.pop %v10
  %v12 = vadd.f32 %v11, 1.0
  %v13 = vrcp.pop %v12
  %v14 = vmul.f32 1.0, %v13
  %15 = vst [vmem:[%s1] sm:$0xff] %v14
  // Predicated region
  $region6: #{fwd.1} parent=0 // pred_check
    _
  $region7: #{fwd.1} parent=0 // pred_check_branch
    %17 = sbr.rel (0) target = $region9
  $region8: #{fwd.1} parent=0 // pred_region
    _
  $region9: #{fwd.1} parent=0 // pred_fallthru
    _
  // Predicated region
  $region10: #{fwd.1} parent=0 // pred_check
    _
  $region11: #{fwd.1} parent=0 // pred_check_branch
    %19 = sbr.rel (0) target = $region13
  $region12: #{fwd.1} parent=0 // pred_region
    _
  $region13: #{fwd.1} parent=0 // pred_fallthru
    _

</llo_original>
